<compile_context>
chip_gen: v6e
topology: v6e:2x2x1
jax: 0.10.0
libtpu: 0.0.40
codegen_flags: <defaults>
</compile_context>

<pallas_src>
import jax
import jax.numpy as jnp
from jax.experimental import pallas as pl
from jax.experimental.pallas import tpu as pltpu

_OFFSETS = (-2, -1, 1, 2)   # 5-wide window offsets (center handled implicitly)


def _make_mfsppf_kernel(H, W, bb):
    HW = H * W

    def kernel(x0_ref, x1_ref, w1_ref, b1_ref, w2_ref, b2_ref, m_ref, o_ref):
        def silu(u):
            # u * sigmoid(u); approx reciprocal -> EUP vrcp slot, not VALU.
            return u * pl.reciprocal(1.0 + jnp.exp(-u), approx=True)

        # Hoisted once per grid step, reused by all 3 pools (and all images).
        vmask = [m_ref[i:i + 1, :] for i in range(4)]        # vertical masks
        hmask = [m_ref[i + 4:i + 5, :] for i in range(4)]    # horizontal masks

        def pool5(z):
            """Separable 5x5 max pool, stride 1, 'same' (-inf outside)."""
            v = z
            for i, dr in enumerate(_OFFSETS):                 # 5x1 vertical
                shifted = pltpu.roll(z, shift=(-dr * W) % HW, axis=1)
                v = jnp.maximum(v, shifted + vmask[i])
            out = v
            for i, dc in enumerate(_OFFSETS):                 # 1x5 horizontal
                shifted = pltpu.roll(v, shift=(-dc) % HW, axis=1)
                out = jnp.maximum(out, shifted + hmask[i])
            return out

        for b in range(bb):   # short static unroll over the batch sub-block
            # cv1: one K=C1 MXU pass over the (aligned) concat of x0|x1.
            xin = jnp.concatenate([x0_ref[b], x1_ref[b]], axis=0)  # (C1p, HW)
            t = jnp.dot(w1_ref[...], xin, preferred_element_type=jnp.float32)
            t = silu(t + b1_ref[...])                              # (C_p, HW)

            # Pool chain.
            y1 = pool5(t)
            y2 = pool5(y1)
            y3 = pool5(y2)

            # cv2: one K=4*C_ MXU pass over cat(t, y1, y2, y3).
            z = jnp.concatenate([t, y1, y2, y3], axis=0)           # (4C_p, HW)
            o = jnp.dot(w2_ref[...], z, preferred_element_type=jnp.float32)
            o = silu(o + b2_ref[...])                              # (C2, HW)

            o_ref[b] = o.astype(o_ref.dtype)

    return kernel


def mfsppf_forward(x0_nchw, x1_nchw, w1, g1, be1, m1, v1, w2, g2, be2, m2, v2,
                   eps=1e-5, batch_block=1):
    """x0: (B, c2, H, W); x1: (B, c2//scale, H, W).  Returns (B, c2, H, W)."""
    B, C2, H, W = x0_nchw.shape
    Cs = x1_nchw.shape[1]
    C_ = w1.shape[1]
    HW = H * W

    def rup(n, m):
        return (n + m - 1) // m * m

    Csp = rup(Cs, 8)     # padded x1 channels (sublane-aligned concat chunk)
    Cp = rup(C_, 8)      # padded cv1 output channels

    # Fold BatchNorm (inference) into per-channel scale/bias, then fold the
    # scale into the static conv weights (only bias add + SiLU stay in-kernel).
    s1 = g1 / jnp.sqrt(v1 + eps)
    b1 = be1 - m1 * s1
    s2 = g2 / jnp.sqrt(v2 + eps)
    b2 = be2 - m2 * s2

    w1f = (w1 * s1[None, :]).T                                 # (C_, C1)
    w2f = (w2 * s2[None, :]).T                                 # (C2, 4*C_)

    # cv1 weights padded: rows C_ -> Cp (zero rows => padded t channels are
    # exactly 0 after SiLU), columns split [C2 | Cs -> Csp] (zero cols).
    w1p = jnp.zeros((Cp, C2 + Csp), jnp.float32)
    w1p = w1p.at[:C_, :C2].set(w1f[:, :C2])
    w1p = w1p.at[:C_, C2:C2 + Cs].set(w1f[:, C2:])
    b1p = jnp.zeros((Cp, 1), jnp.float32).at[:C_, 0].set(b1)

    # cv2 weights padded along K: each of the 4 C_-slices placed in a Cp slot.
    w2p = jnp.zeros((C2, 4, Cp), jnp.float32)
    w2p = w2p.at[:, :, :C_].set(w2f.reshape(C2, 4, C_))
    w2p = w2p.reshape(C2, 4 * Cp)
    b2p = b2.reshape(C2, 1)

    # Channels-first with spatial flattened into the lane dim (pure reshapes).
    x0f = x0_nchw.reshape(B, C2, HW)
    x1f = x1_nchw.reshape(B, Cs, HW)
    if Csp != Cs:
        x1f = jnp.pad(x1f, ((0, 0), (0, Csp - Cs), (0, 0)))

    # Precomputed additive boundary masks (0 where the shifted neighbor is
    # inside the image, -inf where the 5x5 window falls outside): 4 vertical
    # rows then 4 horizontal rows, matching _OFFSETS order.
    pos = jnp.arange(HW, dtype=jnp.int32)
    row, col = pos // W, pos % W
    neg = jnp.float32(-jnp.inf)
    rows = []
    for dr in _OFFSETS:
        rows.append(jnp.where((row + dr >= 0) & (row + dr < H), 0.0, neg))
    for dc in _OFFSETS:
        rows.append(jnp.where((col + dc >= 0) & (col + dc < W), 0.0, neg))
    masks = jnp.stack(rows, axis=0).astype(jnp.float32)        # (8, HW)

    bb = batch_block
    assert B % bb == 0, (B, bb)

    kernel = _make_mfsppf_kernel(H, W, bb)
    out = pl.pallas_call(
        kernel,
        out_shape=jax.ShapeDtypeStruct((B, C2, HW), jnp.float32),
        grid_spec=pltpu.PrefetchScalarGridSpec(
            num_scalar_prefetch=0,
            grid=(B // bb,),
            in_specs=[
                pl.BlockSpec((bb, C2, HW), lambda b: (b, 0, 0)),   # x0
                pl.BlockSpec((bb, Csp, HW), lambda b: (b, 0, 0)),  # x1 (padded)
                pl.BlockSpec((Cp, C2 + Csp), lambda b: (0, 0)),    # cv1 weight
                pl.BlockSpec((Cp, 1), lambda b: (0, 0)),           # cv1 bias
                pl.BlockSpec((C2, 4 * Cp), lambda b: (0, 0)),      # cv2 weight
                pl.BlockSpec((C2, 1), lambda b: (0, 0)),           # cv2 bias
                pl.BlockSpec((8, HW), lambda b: (0, 0)),           # pool masks
            ],
            out_specs=pl.BlockSpec((bb, C2, HW), lambda b: (b, 0, 0)),
        ),
        compiler_params=pltpu.CompilerParams(
            dimension_semantics=("parallel",),
            vmem_limit_bytes=32 * 1024 * 1024),
    )(x0f, x1f, w1p, b1p, w2p, b2p, masks)

    return out.reshape(B, C2, H, W)


def reference(x0, x1, w1, g1, be1, m1, v1, w2, g2, be2, m2, v2, eps=1e-5):
    """Pure-JAX reference (NCHW in/out), mirrors the PyTorch forward."""
    x = jnp.concatenate([x0, x1], axis=1)
    x = jnp.transpose(x, (0, 2, 3, 1))                          # NHWC

    def conv_bn_silu(z, w, g, be, m, v):
        y = jnp.einsum("bhwc,cd->bhwd", z, w,
                       precision=jax.lax.Precision.HIGHEST)
        y = (y - m) / jnp.sqrt(v + eps) * g + be
        return jax.nn.silu(y)

    def mp(z):
        return jax.lax.reduce_window(
            z, -jnp.inf, jax.lax.max,
            window_dimensions=(1, 5, 5, 1), window_strides=(1, 1, 1, 1),
            padding=((0, 0), (2, 2), (2, 2), (0, 0)))

    t = conv_bn_silu(x, w1, g1, be1, m1, v1)
    y1 = mp(t)
    y2 = mp(y1)
    y3 = mp(y2)
    z = jnp.concatenate([t, y1, y2, y3], axis=-1)
    o = conv_bn_silu(z, w2, g2, be2, m2, v2)
    return jnp.transpose(o, (0, 3, 1, 2))


if __name__ == "__main__":
    # Module config: MFSPPF_Module(c1_ignored, c2=8, k=5, scale=2)
    #   -> C1 = c2 + c2//scale = 12, C_ = 6, cv2 input channels = 24, output = 8
    B, C2, scale = 2, 8, 2
    H = W = 16
    C1 = C2 + C2 // scale
    C_ = C1 // 2

    key = jax.random.PRNGKey(0)
    ks = jax.random.split(key, 12)

    # Inputs (NCHW, like the PyTorch module): x = [x0, x1]
    x0 = jax.random.normal(ks[0], (B, C2, H, W), jnp.float32)
    x1 = jax.random.normal(ks[1], (B, C2 // scale, H, W), jnp.float32)

    # Deterministic synthetic parameters.
    # cv1: conv weight stored as (C1, C_) == transposed (C_, C1, 1, 1); BN params.
    w1 = 0.1 * jax.random.normal(ks[2], (C1, C_), jnp.float32)
    g1 = 1.0 + 0.1 * jax.random.normal(ks[3], (C_,), jnp.float32)
    be1 = 0.1 * jax.random.normal(ks[4], (C_,), jnp.float32)
    m1 = 0.1 * jax.random.normal(ks[5], (C_,), jnp.float32)
    v1 = 1.0 + 0.1 * jnp.abs(jax.random.normal(ks[6], (C_,), jnp.float32))
    # cv2: conv weight stored as (4*C_, C2) == transposed (C2, 4*C_, 1, 1); BN.
    w2 = 0.1 * jax.random.normal(ks[7], (4 * C_, C2), jnp.float32)
    g2 = 1.0 + 0.1 * jax.random.normal(ks[8], (C2,), jnp.float32)
    be2 = 0.1 * jax.random.normal(ks[9], (C2,), jnp.float32)
    m2 = 0.1 * jax.random.normal(ks[10], (C2,), jnp.float32)
    v2 = 1.0 + 0.1 * jnp.abs(jax.random.normal(ks[11], (C2,), jnp.float32))

    ref = reference(x0, x1, w1, g1, be1, m1, v1, w2, g2, be2, m2, v2)

    # Default: one image per grid step (>= 2 parallel steps feeds both v7x TCs).
    out = mfsppf_forward(x0, x1, w1, g1, be1, m1, v1, w2, g2, be2, m2, v2)
    out = jax.block_until_ready(out)
    assert out.shape == (B, C2, H, W), out.shape
    assert jnp.allclose(out, ref, atol=3e-3, rtol=3e-3), float(
        jnp.max(jnp.abs(out - ref)))

    # Batched grid step (amortizes per-step overhead on single-TC v5e/v6e).
    out2 = mfsppf_forward(x0, x1, w1, g1, be1, m1, v1, w2, g2, be2, m2, v2,
                          batch_block=2)
    out2 = jax.block_until_ready(out2)
    assert jnp.allclose(out2, ref, atol=3e-3, rtol=3e-3), float(
        jnp.max(jnp.abs(out2 - ref)))

    print("KERNEL_OK")
</pallas_src>

<mosaic_0001>
module attributes {stable_mosaic.version = 11 : i64} {
  func.func @kernel(%arg0: i32, %arg1: memref<1x8x256xf32, #tpu.memory_space<vmem>>, %arg2: memref<1x8x256xf32, #tpu.memory_space<vmem>>, %arg3: memref<8x16xf32, #tpu.memory_space<vmem>>, %arg4: memref<8x1xf32, #tpu.memory_space<vmem>>, %arg5: memref<8x32xf32, #tpu.memory_space<vmem>>, %arg6: memref<8x1xf32, #tpu.memory_space<vmem>>, %arg7: memref<8x256xf32, #tpu.memory_space<vmem>>, %arg8: memref<1x8x256xf32, #tpu.memory_space<vmem>>) attributes {dimension_semantics = [#tpu.dimension_semantics<parallel>], iteration_bounds = array<i64: 2>, scalar_prefetch = 0 : i64, scratch_operands = 0 : i64, tpu.core_type = #tpu.core_type<tc>, window_params = [{transform_indices = @transform_0, window_bounds = array<i64: 1, 8, 256>}, {transform_indices = @transform_1, window_bounds = array<i64: 1, 8, 256>}, {pipeline_mode = #tpu.pipeline_mode<synchronous>, transform_indices = @transform_2, window_bounds = array<i64: 8, 16>}, {pipeline_mode = #tpu.pipeline_mode<synchronous>, transform_indices = @transform_3, window_bounds = array<i64: 8, 1>}, {pipeline_mode = #tpu.pipeline_mode<synchronous>, transform_indices = @transform_4, window_bounds = array<i64: 8, 32>}, {pipeline_mode = #tpu.pipeline_mode<synchronous>, transform_indices = @transform_5, window_bounds = array<i64: 8, 1>}, {pipeline_mode = #tpu.pipeline_mode<synchronous>, transform_indices = @transform_6, window_bounds = array<i64: 8, 256>}, {transform_indices = @transform_7, window_bounds = array<i64: 1, 8, 256>}]} {
    %c0 = arith.constant 0 : index
    %c0_0 = arith.constant 0 : index
    %0 = vector.load %arg7[%c0, %c0_0] : memref<8x256xf32, #tpu.memory_space<vmem>>, vector<1x256xf32>
    %c1 = arith.constant 1 : index
    %c0_1 = arith.constant 0 : index
    %1 = vector.load %arg7[%c1, %c0_1] : memref<8x256xf32, #tpu.memory_space<vmem>>, vector<1x256xf32>
    %c2 = arith.constant 2 : index
    %c0_2 = arith.constant 0 : index
    %2 = vector.load %arg7[%c2, %c0_2] : memref<8x256xf32, #tpu.memory_space<vmem>>, vector<1x256xf32>
    %c3 = arith.constant 3 : index
    %c0_3 = arith.constant 0 : index
    %3 = vector.load %arg7[%c3, %c0_3] : memref<8x256xf32, #tpu.memory_space<vmem>>, vector<1x256xf32>
    %c4 = arith.constant 4 : index
    %c0_4 = arith.constant 0 : index
    %4 = vector.load %arg7[%c4, %c0_4] : memref<8x256xf32, #tpu.memory_space<vmem>>, vector<1x256xf32>
    %c5 = arith.constant 5 : index
    %c0_5 = arith.constant 0 : index
    %5 = vector.load %arg7[%c5, %c0_5] : memref<8x256xf32, #tpu.memory_space<vmem>>, vector<1x256xf32>
    %c6 = arith.constant 6 : index
    %c0_6 = arith.constant 0 : index
    %6 = vector.load %arg7[%c6, %c0_6] : memref<8x256xf32, #tpu.memory_space<vmem>>, vector<1x256xf32>
    %c7 = arith.constant 7 : index
    %c0_7 = arith.constant 0 : index
    %7 = vector.load %arg7[%c7, %c0_7] : memref<8x256xf32, #tpu.memory_space<vmem>>, vector<1x256xf32>
    %c0_8 = arith.constant 0 : index
    %c0_9 = arith.constant 0 : index
    %c0_10 = arith.constant 0 : index
    %8 = vector.load %arg1[%c0_8, %c0_9, %c0_10] : memref<1x8x256xf32, #tpu.memory_space<vmem>>, vector<1x8x256xf32>
    %9 = vector.shape_cast %8 : vector<1x8x256xf32> to vector<8x256xf32>
    %c0_11 = arith.constant 0 : index
    %c0_12 = arith.constant 0 : index
    %c0_13 = arith.constant 0 : index
    %10 = vector.load %arg2[%c0_11, %c0_12, %c0_13] : memref<1x8x256xf32, #tpu.memory_space<vmem>>, vector<1x8x256xf32>
    %11 = vector.shape_cast %10 : vector<1x8x256xf32> to vector<8x256xf32>
    %12 = tpu.concatenate %9, %11 in 0 : vector<8x256xf32>, vector<8x256xf32> -> vector<16x256xf32>
    %c0_14 = arith.constant 0 : index
    %c0_15 = arith.constant 0 : index
    %13 = vector.load %arg3[%c0_14, %c0_15] : memref<8x16xf32, #tpu.memory_space<vmem>>, vector<8x16xf32>
    %cst = arith.constant dense<0.000000e+00> : vector<8x256xf32>
    %14 = tpu.matmul %13, %12, %cst {dimension_numbers = #tpu.dot_dimension_numbers<[1], [0], [0], [1], [0, 0, 1, 1], [], []>} : vector<8x16xf32>, vector<16x256xf32>, vector<8x256xf32> -> vector<8x256xf32>
    %c0_16 = arith.constant 0 : index
    %c0_17 = arith.constant 0 : index
    %15 = vector.load %arg4[%c0_16, %c0_17] : memref<8x1xf32, #tpu.memory_space<vmem>>, vector<8x1xf32>
    %16 = vector.broadcast %15 : vector<8x1xf32> to vector<8x256xf32>
    %17 = arith.addf %14, %16 : vector<8x256xf32>
    %cst_18 = arith.constant 0.000000e+00 : f32
    %18 = vector.broadcast %cst_18 : f32 to vector<8x256xf32>
    %19 = arith.subf %18, %17 : vector<8x256xf32>
    %20 = math.exp %19 : vector<8x256xf32>
    %cst_19 = arith.constant 1.000000e+00 : f32
    %21 = vector.broadcast %cst_19 : f32 to vector<8x256xf32>
    %22 = arith.addf %21, %20 : vector<8x256xf32>
    %23 = tpu.reciprocal %22 {approx = true} : vector<8x256xf32> -> vector<8x256xf32>
    %24 = arith.mulf %17, %23 : vector<8x256xf32>
    %c32_i32 = arith.constant 32 : i32
    %25 = tpu.dynamic_rotate %24 by %c32_i32 dim 1 : vector<8x256xf32>, i32 -> vector<8x256xf32>
    %26 = vector.broadcast %0 : vector<1x256xf32> to vector<8x256xf32>
    %27 = arith.addf %25, %26 : vector<8x256xf32>
    %28 = arith.maximumf %24, %27 : vector<8x256xf32>
    %c16_i32 = arith.constant 16 : i32
    %29 = tpu.dynamic_rotate %24 by %c16_i32 dim 1 : vector<8x256xf32>, i32 -> vector<8x256xf32>
    %30 = vector.broadcast %1 : vector<1x256xf32> to vector<8x256xf32>
    %31 = arith.addf %29, %30 : vector<8x256xf32>
    %32 = arith.maximumf %28, %31 : vector<8x256xf32>
    %c240_i32 = arith.constant 240 : i32
    %33 = tpu.dynamic_rotate %24 by %c240_i32 dim 1 : vector<8x256xf32>, i32 -> vector<8x256xf32>
    %34 = vector.broadcast %2 : vector<1x256xf32> to vector<8x256xf32>
    %35 = arith.addf %33, %34 : vector<8x256xf32>
    %36 = arith.maximumf %32, %35 : vector<8x256xf32>
    %c224_i32 = arith.constant 224 : i32
    %37 = tpu.dynamic_rotate %24 by %c224_i32 dim 1 : vector<8x256xf32>, i32 -> vector<8x256xf32>
    %38 = vector.broadcast %3 : vector<1x256xf32> to vector<8x256xf32>
    %39 = arith.addf %37, %38 : vector<8x256xf32>
    %40 = arith.maximumf %36, %39 : vector<8x256xf32>
    %c2_i32 = arith.constant 2 : i32
    %41 = tpu.dynamic_rotate %40 by %c2_i32 dim 1 : vector<8x256xf32>, i32 -> vector<8x256xf32>
    %42 = vector.broadcast %4 : vector<1x256xf32> to vector<8x256xf32>
    %43 = arith.addf %41, %42 : vector<8x256xf32>
    %44 = arith.maximumf %40, %43 : vector<8x256xf32>
    %c1_i32 = arith.constant 1 : i32
    %45 = tpu.dynamic_rotate %40 by %c1_i32 dim 1 : vector<8x256xf32>, i32 -> vector<8x256xf32>
    %46 = vector.broadcast %5 : vector<1x256xf32> to vector<8x256xf32>
    %47 = arith.addf %45, %46 : vector<8x256xf32>
    %48 = arith.maximumf %44, %47 : vector<8x256xf32>
    %c255_i32 = arith.constant 255 : i32
    %49 = tpu.dynamic_rotate %40 by %c255_i32 dim 1 : vector<8x256xf32>, i32 -> vector<8x256xf32>
    %50 = vector.broadcast %6 : vector<1x256xf32> to vector<8x256xf32>
    %51 = arith.addf %49, %50 : vector<8x256xf32>
    %52 = arith.maximumf %48, %51 : vector<8x256xf32>
    %c254_i32 = arith.constant 254 : i32
    %53 = tpu.dynamic_rotate %40 by %c254_i32 dim 1 : vector<8x256xf32>, i32 -> vector<8x256xf32>
    %54 = vector.broadcast %7 : vector<1x256xf32> to vector<8x256xf32>
    %55 = arith.addf %53, %54 : vector<8x256xf32>
    %56 = arith.maximumf %52, %55 : vector<8x256xf32>
    %c32_i32_20 = arith.constant 32 : i32
    %57 = tpu.dynamic_rotate %56 by %c32_i32_20 dim 1 : vector<8x256xf32>, i32 -> vector<8x256xf32>
    %58 = vector.broadcast %0 : vector<1x256xf32> to vector<8x256xf32>
    %59 = arith.addf %57, %58 : vector<8x256xf32>
    %60 = arith.maximumf %56, %59 : vector<8x256xf32>
    %c16_i32_21 = arith.constant 16 : i32
    %61 = tpu.dynamic_rotate %56 by %c16_i32_21 dim 1 : vector<8x256xf32>, i32 -> vector<8x256xf32>
    %62 = vector.broadcast %1 : vector<1x256xf32> to vector<8x256xf32>
    %63 = arith.addf %61, %62 : vector<8x256xf32>
    %64 = arith.maximumf %60, %63 : vector<8x256xf32>
    %c240_i32_22 = arith.constant 240 : i32
    %65 = tpu.dynamic_rotate %56 by %c240_i32_22 dim 1 : vector<8x256xf32>, i32 -> vector<8x256xf32>
    %66 = vector.broadcast %2 : vector<1x256xf32> to vector<8x256xf32>
    %67 = arith.addf %65, %66 : vector<8x256xf32>
    %68 = arith.maximumf %64, %67 : vector<8x256xf32>
    %c224_i32_23 = arith.constant 224 : i32
    %69 = tpu.dynamic_rotate %56 by %c224_i32_23 dim 1 : vector<8x256xf32>, i32 -> vector<8x256xf32>
    %70 = vector.broadcast %3 : vector<1x256xf32> to vector<8x256xf32>
    %71 = arith.addf %69, %70 : vector<8x256xf32>
    %72 = arith.maximumf %68, %71 : vector<8x256xf32>
    %c2_i32_24 = arith.constant 2 : i32
    %73 = tpu.dynamic_rotate %72 by %c2_i32_24 dim 1 : vector<8x256xf32>, i32 -> vector<8x256xf32>
    %74 = vector.broadcast %4 : vector<1x256xf32> to vector<8x256xf32>
    %75 = arith.addf %73, %74 : vector<8x256xf32>
    %76 = arith.maximumf %72, %75 : vector<8x256xf32>
    %c1_i32_25 = arith.constant 1 : i32
    %77 = tpu.dynamic_rotate %72 by %c1_i32_25 dim 1 : vector<8x256xf32>, i32 -> vector<8x256xf32>
    %78 = vector.broadcast %5 : vector<1x256xf32> to vector<8x256xf32>
    %79 = arith.addf %77, %78 : vector<8x256xf32>
    %80 = arith.maximumf %76, %79 : vector<8x256xf32>
    %c255_i32_26 = arith.constant 255 : i32
    %81 = tpu.dynamic_rotate %72 by %c255_i32_26 dim 1 : vector<8x256xf32>, i32 -> vector<8x256xf32>
    %82 = vector.broadcast %6 : vector<1x256xf32> to vector<8x256xf32>
    %83 = arith.addf %81, %82 : vector<8x256xf32>
    %84 = arith.maximumf %80, %83 : vector<8x256xf32>
    %c254_i32_27 = arith.constant 254 : i32
    %85 = tpu.dynamic_rotate %72 by %c254_i32_27 dim 1 : vector<8x256xf32>, i32 -> vector<8x256xf32>
    %86 = vector.broadcast %7 : vector<1x256xf32> to vector<8x256xf32>
    %87 = arith.addf %85, %86 : vector<8x256xf32>
    %88 = arith.maximumf %84, %87 : vector<8x256xf32>
    %c32_i32_28 = arith.constant 32 : i32
    %89 = tpu.dynamic_rotate %88 by %c32_i32_28 dim 1 : vector<8x256xf32>, i32 -> vector<8x256xf32>
    %90 = vector.broadcast %0 : vector<1x256xf32> to vector<8x256xf32>
    %91 = arith.addf %89, %90 : vector<8x256xf32>
    %92 = arith.maximumf %88, %91 : vector<8x256xf32>
    %c16_i32_29 = arith.constant 16 : i32
    %93 = tpu.dynamic_rotate %88 by %c16_i32_29 dim 1 : vector<8x256xf32>, i32 -> vector<8x256xf32>
    %94 = vector.broadcast %1 : vector<1x256xf32> to vector<8x256xf32>
    %95 = arith.addf %93, %94 : vector<8x256xf32>
    %96 = arith.maximumf %92, %95 : vector<8x256xf32>
    %c240_i32_30 = arith.constant 240 : i32
    %97 = tpu.dynamic_rotate %88 by %c240_i32_30 dim 1 : vector<8x256xf32>, i32 -> vector<8x256xf32>
    %98 = vector.broadcast %2 : vector<1x256xf32> to vector<8x256xf32>
    %99 = arith.addf %97, %98 : vector<8x256xf32>
    %100 = arith.maximumf %96, %99 : vector<8x256xf32>
    %c224_i32_31 = arith.constant 224 : i32
    %101 = tpu.dynamic_rotate %88 by %c224_i32_31 dim 1 : vector<8x256xf32>, i32 -> vector<8x256xf32>
    %102 = vector.broadcast %3 : vector<1x256xf32> to vector<8x256xf32>
    %103 = arith.addf %101, %102 : vector<8x256xf32>
    %104 = arith.maximumf %100, %103 : vector<8x256xf32>
    %c2_i32_32 = arith.constant 2 : i32
    %105 = tpu.dynamic_rotate %104 by %c2_i32_32 dim 1 : vector<8x256xf32>, i32 -> vector<8x256xf32>
    %106 = vector.broadcast %4 : vector<1x256xf32> to vector<8x256xf32>
    %107 = arith.addf %105, %106 : vector<8x256xf32>
    %108 = arith.maximumf %104, %107 : vector<8x256xf32>
    %c1_i32_33 = arith.constant 1 : i32
    %109 = tpu.dynamic_rotate %104 by %c1_i32_33 dim 1 : vector<8x256xf32>, i32 -> vector<8x256xf32>
    %110 = vector.broadcast %5 : vector<1x256xf32> to vector<8x256xf32>
    %111 = arith.addf %109, %110 : vector<8x256xf32>
    %112 = arith.maximumf %108, %111 : vector<8x256xf32>
    %c255_i32_34 = arith.constant 255 : i32
    %113 = tpu.dynamic_rotate %104 by %c255_i32_34 dim 1 : vector<8x256xf32>, i32 -> vector<8x256xf32>
    %114 = vector.broadcast %6 : vector<1x256xf32> to vector<8x256xf32>
    %115 = arith.addf %113, %114 : vector<8x256xf32>
    %116 = arith.maximumf %112, %115 : vector<8x256xf32>
    %c254_i32_35 = arith.constant 254 : i32
    %117 = tpu.dynamic_rotate %104 by %c254_i32_35 dim 1 : vector<8x256xf32>, i32 -> vector<8x256xf32>
    %118 = vector.broadcast %7 : vector<1x256xf32> to vector<8x256xf32>
    %119 = arith.addf %117, %118 : vector<8x256xf32>
    %120 = arith.maximumf %116, %119 : vector<8x256xf32>
    %121 = tpu.concatenate %24, %56, %88, %120 in 0 : vector<8x256xf32>, vector<8x256xf32>, vector<8x256xf32>, vector<8x256xf32> -> vector<32x256xf32>
    %c0_36 = arith.constant 0 : index
    %c0_37 = arith.constant 0 : index
    %122 = vector.load %arg5[%c0_36, %c0_37] : memref<8x32xf32, #tpu.memory_space<vmem>>, vector<8x32xf32>
    %cst_38 = arith.constant dense<0.000000e+00> : vector<8x256xf32>
    %123 = tpu.matmul %122, %121, %cst_38 {dimension_numbers = #tpu.dot_dimension_numbers<[1], [0], [0], [1], [0, 0, 1, 1], [], []>} : vector<8x32xf32>, vector<32x256xf32>, vector<8x256xf32> -> vector<8x256xf32>
    %c0_39 = arith.constant 0 : index
    %c0_40 = arith.constant 0 : index
    %124 = vector.load %arg6[%c0_39, %c0_40] : memref<8x1xf32, #tpu.memory_space<vmem>>, vector<8x1xf32>
    %125 = vector.broadcast %124 : vector<8x1xf32> to vector<8x256xf32>
    %126 = arith.addf %123, %125 : vector<8x256xf32>
    %cst_41 = arith.constant 0.000000e+00 : f32
    %127 = vector.broadcast %cst_41 : f32 to vector<8x256xf32>
    %128 = arith.subf %127, %126 : vector<8x256xf32>
    %129 = math.exp %128 : vector<8x256xf32>
    %cst_42 = arith.constant 1.000000e+00 : f32
    %130 = vector.broadcast %cst_42 : f32 to vector<8x256xf32>
    %131 = arith.addf %130, %129 : vector<8x256xf32>
    %132 = tpu.reciprocal %131 {approx = true} : vector<8x256xf32> -> vector<8x256xf32>
    %133 = arith.mulf %126, %132 : vector<8x256xf32>
    %c0_43 = arith.constant 0 : index
    %c0_44 = arith.constant 0 : index
    %c0_45 = arith.constant 0 : index
    %134 = vector.load %arg8[%c0_43, %c0_44, %c0_45] : memref<1x8x256xf32, #tpu.memory_space<vmem>>, vector<1x8x256xf32>
    %135 = vector.shape_cast %134 : vector<1x8x256xf32> to vector<8x256xf32>
    %136 = vector.shape_cast %133 : vector<8x256xf32> to vector<1x8x256xf32>
    tpu.vector_store %arg8[%c0_43, %c0_44, %c0_45], %136 {strides = array<i32>} : memref<1x8x256xf32, #tpu.memory_space<vmem>>, vector<1x8x256xf32>,
    return
  }
  func.func @transform_0(%arg0: i32) -> (i32, i32, i32) {
    %c0_i32 = arith.constant 0 : i32
    %c0_i32_0 = arith.constant 0 : i32
    %c0_i32_1 = arith.constant 0 : i32
    return %arg0, %c0_i32, %c0_i32_0 : i32, i32, i32
  }
  func.func @transform_1(%arg0: i32) -> (i32, i32, i32) {
    %c0_i32 = arith.constant 0 : i32
    %c0_i32_0 = arith.constant 0 : i32
    %c0_i32_1 = arith.constant 0 : i32
    return %arg0, %c0_i32, %c0_i32_0 : i32, i32, i32
  }
  func.func @transform_2(%arg0: i32) -> (i32, i32) {
    %c0_i32 = arith.constant 0 : i32
    %c0_i32_0 = arith.constant 0 : i32
    %c0_i32_1 = arith.constant 0 : i32
    return %c0_i32, %c0_i32_0 : i32, i32
  }
  func.func @transform_3(%arg0: i32) -> (i32, i32) {
    %c0_i32 = arith.constant 0 : i32
    %c0_i32_0 = arith.constant 0 : i32
    %c0_i32_1 = arith.constant 0 : i32
    return %c0_i32, %c0_i32_0 : i32, i32
  }
  func.func @transform_4(%arg0: i32) -> (i32, i32) {
    %c0_i32 = arith.constant 0 : i32
    %c0_i32_0 = arith.constant 0 : i32
    %c0_i32_1 = arith.constant 0 : i32
    return %c0_i32, %c0_i32_0 : i32, i32
  }
  func.func @transform_5(%arg0: i32) -> (i32, i32) {
    %c0_i32 = arith.constant 0 : i32
    %c0_i32_0 = arith.constant 0 : i32
    %c0_i32_1 = arith.constant 0 : i32
    return %c0_i32, %c0_i32_0 : i32, i32
  }
  func.func @transform_6(%arg0: i32) -> (i32, i32) {
    %c0_i32 = arith.constant 0 : i32
    %c0_i32_0 = arith.constant 0 : i32
    %c0_i32_1 = arith.constant 0 : i32
    return %c0_i32, %c0_i32_0 : i32, i32
  }
  func.func @transform_7(%arg0: i32) -> (i32, i32, i32) {
    %c0_i32 = arith.constant 0 : i32
    %c0_i32_0 = arith.constant 0 : i32
    %c0_i32_1 = arith.constant 0 : i32
    return %arg0, %c0_i32, %c0_i32_0 : i32, i32, i32
  }
}

</mosaic_0001>

<llo_original>
// kernel: tpu_custom_call.1
$region0: #{tpu_custom_call.1}
  #allocation0 [shape = 'u32[]', space=smem, size = 0x4, offset = 0x4, fixed_abs, tag = 'smem constant byte address 0x4 - core index']
  #allocation1 [shape = 'u32[144,128]{1,0:T(1,128)}', space=vmem, size = 0x12000, scoped, tag = 'internal scratch']
  %s0 = inlined_call_operand.hbm [shape: f32[2,8,256], index: 0, kind: input, shape index: {}]
  %s1 = inlined_call_operand.hbm [shape: f32[2,8,256], index: 1, kind: input, shape index: {}]
  %s2 = inlined_call_operand.vmem [shape: f32[8,16], index: 2, kind: input, shape index: {}]
  %s3 = inlined_call_operand.vmem [shape: f32[8,1], index: 3, kind: input, shape index: {}]
  %s4 = inlined_call_operand.hbm [shape: f32[8,32], index: 4, kind: input, shape index: {}]
  %s5 = inlined_call_operand.vmem [shape: f32[8,1], index: 5, kind: input, shape index: {}]
  %s6 = inlined_call_operand.vmem [shape: f32[8,256], index: 6, kind: input, shape index: {}]
  %s7 = inlined_call_operand.hbm [shape: f32[2,8,256], index: 7, kind: output, shape index: {}]
  %s8 = sld [smem:[#allocation0]]
  $region73: #{tpu_custom_call.1} parent=0
    _
  %s10 = ssub.s32 1, %s8
  %s11 = scalar_select 0, %s10, %s8
  $region1: #{tpu_custom_call.1} parent=0
    #allocation2 [shape = 'u8[16384]{0}', space=vmem, size = 0x4000, scoped, tag = 'input window, operand 0']
    #allocation3 [shape = 's32[2]{0}', space=sflag, size = 0x8, scoped, tag = 'scoped memory for tpu_custom_call.1']
    #allocation4 [shape = 's32[2]{0}', space=sflag, size = 0x8, scoped, tag = 'scoped memory for tpu_custom_call.1']
    #allocation5 [shape = 'u8[16384]{0}', space=vmem, size = 0x4000, scoped, tag = 'input window, operand 1']
    #allocation6 [shape = 's32[2]{0}', space=sflag, size = 0x8, scoped, tag = 'scoped memory for tpu_custom_call.1']
    #allocation7 [shape = 'u8[4096]{0}', space=vmem, size = 0x1000, scoped, tag = 'input window, operand 4, single buffered']
    #allocation8 [shape = 'u8[16384]{0}', space=vmem, size = 0x4000, scoped, tag = 'output window, operand 0']
    %12 = vsyncpa [#allocation3], 0
    %s13 = scalar_lea.sflag [#allocation3], 1
    %14 = vsyncpa %s13, 0
    %15 = vsyncpa [#allocation6], 0
    %s16 = scalar_lea.sflag [#allocation6], 1
    %17 = vsyncpa %s16, 0
    %18 = vsyncpa [#allocation4], 0
    %s19 = scalar_lea.sflag [#allocation4], 1
    %20 = vsyncpa %s19, 0
    loop: start=0, step=1, limit=4
    $region2: #{tpu_custom_call.1} parent=1 // loop_pre_header
      _
    $region3: #{tpu_custom_call.1} parent=1 // loop_header
      %s22 = sphi 0, %s26
      %p23 = scmp.ge.s32.totalorder %s22, 4
      %s32 = sphi 0, %s34
      %s35 = sphi 0, %s32
      %s36 = sphi 0, %s35
      %s52 = sphi 0, %s36
      %s58 = sphi 0, %s60
      %s61 = sphi 0, %s58
      %s62 = sphi 0, %s61
      %s78 = sphi 0, %s62
      %s82 = sphi 0, %s82
      %s84 = sphi 0, %s82
      %s85 = sphi 0, %s84
      %s99 = sphi 0, %s85
      %s103 = sphi 0, %s103
      %s105 = sphi 0, %s103
      %s106 = sphi 0, %s105
      %s120 = sphi 0, %s106
      %s124 = sphi 0, %s124
      %s126 = sphi 0, %s124
      %s127 = sphi 0, %s126
      %s141 = sphi 0, %s127
      %s145 = sphi 0, %s145
      %s147 = sphi 0, %s145
      %s148 = sphi 0, %s147
      %s162 = sphi 0, %s148
      %s166 = sphi 0, %s166
      %s168 = sphi 0, %s166
      %s169 = sphi 0, %s168
      %s183 = sphi 0, %s169
      %s189 = sphi 0, %s191
      %s192 = sphi 0, %s189
      %s193 = sphi 0, %s192
      %s209 = sphi 0, %s193
    $region4: #{tpu_custom_call.1} parent=1 // loop_header_branch
      %25 = sbr.rel (%p23) target = $region8
    $region5: #{tpu_custom_call.1} parent=1 // loop_body
      %s27 = ssub.s32 %s22, 1
      %s28 = ssub.s32 %s22, 2
      %s29 = sadd.s32 %s22, 1
      %s30 = ssub.s32 %s22, %s29
      %p31 = scmp.eq.s32.totalorder %s30, 0
      %s33 = sadd.s32 %s32, 1
      %s34 = scalar_select %p31, %s32, %s33
      %p37 = pneg %p31
      %p38 = scmp.eq.s32.totalorder %s22, 1
      %p39 = por %p37, %p38
      %p40 = scmp.ne.s32.totalorder %s32, %s35
      %p41 = scmp.eq.s32.totalorder %s22, 0
      %p42 = por %p40, %p41
      %p43 = scmp.ne.s32.totalorder %s32, %s35
      %p44 = scmp.eq.s32.totalorder %s27, 1
      %p45 = por %p43, %p44
      %p46 = scmp.ne.s32.totalorder %s35, %s36
      %p47 = scmp.eq.s32.totalorder %s27, 0
      %p48 = por %p46, %p47
      %p49 = scmp.ne.s32.totalorder %s35, %s36
      %p50 = scmp.eq.s32.totalorder %s28, 1
      %p51 = por %p49, %p50
      %p53 = scmp.ne.s32.totalorder %s36, %s52
      %p54 = scmp.eq.s32.totalorder %s28, 0
      %p55 = por %p53, %p54
      %s56 = ssub.s32 %s22, %s29
      %p57 = scmp.eq.s32.totalorder %s56, 0
      %s59 = sadd.s32 %s58, 1
      %s60 = scalar_select %p57, %s58, %s59
      %p63 = pneg %p57
      %p64 = scmp.eq.s32.totalorder %s22, 1
      %p65 = por %p63, %p64
      %p66 = scmp.ne.s32.totalorder %s58, %s61
      %p67 = scmp.eq.s32.totalorder %s22, 0
      %p68 = por %p66, %p67
      %p69 = scmp.ne.s32.totalorder %s58, %s61
      %p70 = scmp.eq.s32.totalorder %s27, 1
      %p71 = por %p69, %p70
      %p72 = scmp.ne.s32.totalorder %s61, %s62
      %p73 = scmp.eq.s32.totalorder %s27, 0
      %p74 = por %p72, %p73
      %p75 = scmp.ne.s32.totalorder %s61, %s62
      %p76 = scmp.eq.s32.totalorder %s28, 1
      %p77 = por %p75, %p76
      %p79 = scmp.ne.s32.totalorder %s62, %s78
      %p80 = scmp.eq.s32.totalorder %s28, 0
      %p81 = por %p79, %p80
      %s83 = sadd.s32 %s82, 1
      %p86 = scmp.eq.s32.totalorder %s22, 1
      %p87 = scmp.ne.s32.totalorder %s82, %s84
      %p88 = scmp.eq.s32.totalorder %s22, 0
      %p89 = por %p87, %p88
      %p90 = scmp.ne.s32.totalorder %s82, %s84
      %p91 = scmp.eq.s32.totalorder %s27, 1
      %p92 = por %p90, %p91
      %p93 = scmp.ne.s32.totalorder %s84, %s85
      %p94 = scmp.eq.s32.totalorder %s27, 0
      %p95 = por %p93, %p94
      %p96 = scmp.ne.s32.totalorder %s84, %s85
      %p97 = scmp.eq.s32.totalorder %s28, 1
      %p98 = por %p96, %p97
      %p100 = scmp.ne.s32.totalorder %s85, %s99
      %p101 = scmp.eq.s32.totalorder %s28, 0
      %p102 = por %p100, %p101
      %s104 = sadd.s32 %s103, 1
      %p107 = scmp.eq.s32.totalorder %s22, 1
      %p108 = scmp.ne.s32.totalorder %s103, %s105
      %p109 = scmp.eq.s32.totalorder %s22, 0
      %p110 = por %p108, %p109
      %p111 = scmp.ne.s32.totalorder %s103, %s105
      %p112 = scmp.eq.s32.totalorder %s27, 1
      %p113 = por %p111, %p112
      %p114 = scmp.ne.s32.totalorder %s105, %s106
      %p115 = scmp.eq.s32.totalorder %s27, 0
      %p116 = por %p114, %p115
      %p117 = scmp.ne.s32.totalorder %s105, %s106
      %p118 = scmp.eq.s32.totalorder %s28, 1
      %p119 = por %p117, %p118
      %p121 = scmp.ne.s32.totalorder %s106, %s120
      %p122 = scmp.eq.s32.totalorder %s28, 0
      %p123 = por %p121, %p122
      %s125 = sadd.s32 %s124, 1
      %p128 = scmp.eq.s32.totalorder %s22, 1
      %p129 = scmp.ne.s32.totalorder %s124, %s126
      %p130 = scmp.eq.s32.totalorder %s22, 0
      %p131 = por %p129, %p130
      %p132 = scmp.ne.s32.totalorder %s124, %s126
      %p133 = scmp.eq.s32.totalorder %s27, 1
      %p134 = por %p132, %p133
      %p135 = scmp.ne.s32.totalorder %s126, %s127
      %p136 = scmp.eq.s32.totalorder %s27, 0
      %p137 = por %p135, %p136
      %p138 = scmp.ne.s32.totalorder %s126, %s127
      %p139 = scmp.eq.s32.totalorder %s28, 1
      %p140 = por %p138, %p139
      %p142 = scmp.ne.s32.totalorder %s127, %s141
      %p143 = scmp.eq.s32.totalorder %s28, 0
      %p144 = por %p142, %p143
      %s146 = sadd.s32 %s145, 1
      %p149 = scmp.eq.s32.totalorder %s22, 1
      %p150 = scmp.ne.s32.totalorder %s145, %s147
      %p151 = scmp.eq.s32.totalorder %s22, 0
      %p152 = por %p150, %p151
      %p153 = scmp.ne.s32.totalorder %s145, %s147
      %p154 = scmp.eq.s32.totalorder %s27, 1
      %p155 = por %p153, %p154
      %p156 = scmp.ne.s32.totalorder %s147, %s148
      %p157 = scmp.eq.s32.totalorder %s27, 0
      %p158 = por %p156, %p157
      %p159 = scmp.ne.s32.totalorder %s147, %s148
      %p160 = scmp.eq.s32.totalorder %s28, 1
      %p161 = por %p159, %p160
      %p163 = scmp.ne.s32.totalorder %s148, %s162
      %p164 = scmp.eq.s32.totalorder %s28, 0
      %p165 = por %p163, %p164
      %s167 = sadd.s32 %s166, 1
      %p170 = scmp.eq.s32.totalorder %s22, 1
      %p171 = scmp.ne.s32.totalorder %s166, %s168
      %p172 = scmp.eq.s32.totalorder %s22, 0
      %p173 = por %p171, %p172
      %p174 = scmp.ne.s32.totalorder %s166, %s168
      %p175 = scmp.eq.s32.totalorder %s27, 1
      %p176 = por %p174, %p175
      %p177 = scmp.ne.s32.totalorder %s168, %s169
      %p178 = scmp.eq.s32.totalorder %s27, 0
      %p179 = por %p177, %p178
      %p180 = scmp.ne.s32.totalorder %s168, %s169
      %p181 = scmp.eq.s32.totalorder %s28, 1
      %p182 = por %p180, %p181
      %p184 = scmp.ne.s32.totalorder %s169, %s183
      %p185 = scmp.eq.s32.totalorder %s28, 0
      %p186 = por %p184, %p185
      %s187 = ssub.s32 %s22, %s29
      %p188 = scmp.eq.s32.totalorder %s187, 0
      %s190 = sadd.s32 %s189, 1
      %s191 = scalar_select %p188, %s189, %s190
      %p194 = pneg %p188
      %p195 = scmp.eq.s32.totalorder %s22, 1
      %p196 = por %p194, %p195
      %p197 = scmp.ne.s32.totalorder %s189, %s192
      %p198 = scmp.eq.s32.totalorder %s22, 0
      %p199 = por %p197, %p198
      %p200 = scmp.ne.s32.totalorder %s189, %s192
      %p201 = scmp.eq.s32.totalorder %s27, 1
      %p202 = por %p200, %p201
      %p203 = scmp.ne.s32.totalorder %s192, %s193
      %p204 = scmp.eq.s32.totalorder %s27, 0
      %p205 = por %p203, %p204
      %p206 = scmp.ne.s32.totalorder %s192, %s193
      %p207 = scmp.eq.s32.totalorder %s28, 1
      %p208 = por %p206, %p207
      %p210 = scmp.ne.s32.totalorder %s193, %s209
      %p211 = scmp.eq.s32.totalorder %s28, 0
      %p212 = por %p210, %p211
      %p213 = scmp.le.s32.totalorder 1, %s22
      %p214 = scmp.lt.s32.totalorder %s22, 3
      %p215 = pnand %p213, %p214
      %p216 = pneg %p215
      // Predicated region
      $region9: #{tpu_custom_call.1} parent=5 // pred_check
        _
      $region10: #{tpu_custom_call.1} parent=5 // pred_check_branch
        %218 = sbr.rel (%p215) target = $region12
      $region11: #{tpu_custom_call.1} parent=5 // pred_region
        %s219 = ssub.s32 %s22, 1
        // Predicated region
        $region13: #{tpu_custom_call.1} parent=11 // pred_check
          %p220 = pneg %p95
        $region14: #{tpu_custom_call.1} parent=11 // pred_check_branch
          %222 = sbr.rel (%p220) target = $region16
        $region15: #{tpu_custom_call.1} parent=11 // pred_region
          _
        $region16: #{tpu_custom_call.1} parent=11 // pred_fallthru
          _
        // Predicated region
        $region17: #{tpu_custom_call.1} parent=11 // pred_check
          %p223 = pneg %p116
        $region18: #{tpu_custom_call.1} parent=11 // pred_check_branch
          %225 = sbr.rel (%p223) target = $region20
        $region19: #{tpu_custom_call.1} parent=11 // pred_region
          _
        $region20: #{tpu_custom_call.1} parent=11 // pred_fallthru
          _
        // Predicated region
        $region21: #{tpu_custom_call.1} parent=11 // pred_check
          %p226 = pneg %p137
        $region22: #{tpu_custom_call.1} parent=11 // pred_check_branch
          %228 = sbr.rel (%p226) target = $region24
        $region23: #{tpu_custom_call.1} parent=11 // pred_region
          %s230 = ssub.s32 128, 128
          %231 = vsyncadd [#allocation6], %s230
          %s233 = sshll.u32 [#allocation7], 4
          %s234 = int_to_ptr.vmem [resolvable:$true] %s233
          %236 = dma.hbm_to_vmem [thread:$0]  %s4, 128, %s234, [#allocation6]
        $region24: #{tpu_custom_call.1} parent=11 // pred_fallthru
          _
        // Predicated region
        $region25: #{tpu_custom_call.1} parent=11 // pred_check
          %p237 = pneg %p158
        $region26: #{tpu_custom_call.1} parent=11 // pred_check_branch
          %239 = sbr.rel (%p237) target = $region28
        $region27: #{tpu_custom_call.1} parent=11 // pred_region
          _
        $region28: #{tpu_custom_call.1} parent=11 // pred_fallthru
          _
        // Predicated region
        $region29: #{tpu_custom_call.1} parent=11 // pred_check
          %p240 = pneg %p179
        $region30: #{tpu_custom_call.1} parent=11 // pred_check_branch
          %242 = sbr.rel (%p240) target = $region32
        $region31: #{tpu_custom_call.1} parent=11 // pred_region
          _
        $region32: #{tpu_custom_call.1} parent=11 // pred_fallthru
          _
      $region12: #{tpu_custom_call.1} parent=5 // pred_fallthru
        _
      %p243 = scmp.lt.s32.totalorder %s22, 2
      // Predicated region
      $region33: #{tpu_custom_call.1} parent=5 // pred_check
        %p244 = pneg %p243
      $region34: #{tpu_custom_call.1} parent=5 // pred_check_branch
        %246 = sbr.rel (%p244) target = $region36
      $region35: #{tpu_custom_call.1} parent=5 // pred_region
        // Predicated region
        $region37: #{tpu_custom_call.1} parent=35 // pred_check
          %p247 = pneg %p42
        $region38: #{tpu_custom_call.1} parent=35 // pred_check_branch
          %249 = sbr.rel (%p247) target = $region40
        $region39: #{tpu_custom_call.1} parent=35 // pred_region
          %s250 = sand.u32 %s32, 1
          %s251 = scalar_lea.sflag [#allocation3], %s250
          %s252 = sand.u32 %s32, 1
          %s253 = smul.addr %s252, 16
          %s254 = scalar_lea.vmem [#allocation2], %s253
          %s256 = ssub.s32 256, 256
          %257 = vsyncadd %s251, %s256
          %s258 = smul.addr %s22, 2
          %s259 = smul.addr %s258, 128
          %s260 = scalar_lea.hbm %s0, %s259
          %s262 = sshll.u32 %s254, 4
          %s263 = int_to_ptr.vmem [resolvable:$true] %s262
          %265 = dma.hbm_to_vmem [thread:$0]  %s260, 256, %s263, %s251
        $region40: #{tpu_custom_call.1} parent=35 // pred_fallthru
          _
        // Predicated region
        $region41: #{tpu_custom_call.1} parent=35 // pred_check
          %p266 = pneg %p68
        $region42: #{tpu_custom_call.1} parent=35 // pred_check_branch
          %268 = sbr.rel (%p266) target = $region44
        $region43: #{tpu_custom_call.1} parent=35 // pred_region
          %s269 = sand.u32 %s22, 1
          %s270 = scalar_lea.sflag [#allocation6], %s269
          %s271 = sand.u32 %s58, 1
          %s272 = smul.addr %s271, 16
          %s273 = scalar_lea.vmem [#allocation5], %s272
          %s275 = ssub.s32 256, 256
          %276 = vsyncadd %s270, %s275
          %s277 = smul.addr %s22, 2
          %s278 = smul.addr %s277, 128
          %s279 = scalar_lea.hbm %s1, %s278
          %s281 = sshll.u32 %s273, 4
          %s282 = int_to_ptr.vmem [resolvable:$true] %s281
          %284 = dma.hbm_to_vmem [thread:$0]  %s279, 256, %s282, %s270
        $region44: #{tpu_custom_call.1} parent=35 // pred_fallthru
          _
      $region36: #{tpu_custom_call.1} parent=5 // pred_fallthru
        _
      %p285 = scmp.le.s32.totalorder 1, %s22
      %p286 = scmp.lt.s32.totalorder %s22, 3
      %p287 = pnand %p285, %p286
      %p288 = pneg %p287
      // Predicated region
      $region45: #{tpu_custom_call.1} parent=5 // pred_check
        _
      $region46: #{tpu_custom_call.1} parent=5 // pred_check_branch
        %290 = sbr.rel (%p287) target = $region48
      $region47: #{tpu_custom_call.1} parent=5 // pred_region
        %s291 = ssub.s32 %s22, 1
        %s292 = sand.u32 %s35, 1
        %s293 = scalar_lea.sflag [#allocation3], %s292
        %s294 = sand.u32 %s35, 1
        %s295 = smul.addr %s294, 16
        %s296 = scalar_lea.vmem [#allocation2], %s295
        // Predicated region
        $region49: #{tpu_custom_call.1} parent=47 // pred_check
          %p297 = pneg %p48
        $region50: #{tpu_custom_call.1} parent=47 // pred_check_branch
          %299 = sbr.rel (%p297) target = $region52
        $region51: #{tpu_custom_call.1} parent=47 // pred_region
          %300 = dma.done %s293, 256
        $region52: #{tpu_custom_call.1} parent=47 // pred_fallthru
          _
        %s301 = sand.u32 %s27, 1
        %s302 = scalar_lea.sflag [#allocation6], %s301
        %s303 = sand.u32 %s61, 1
        %s304 = smul.addr %s303, 16
        %s305 = scalar_lea.vmem [#allocation5], %s304
        // Predicated region
        $region53: #{tpu_custom_call.1} parent=47 // pred_check
          %p306 = pneg %p74
        $region54: #{tpu_custom_call.1} parent=47 // pred_check_branch
          %308 = sbr.rel (%p306) target = $region56
        $region55: #{tpu_custom_call.1} parent=47 // pred_region
          %309 = dma.done %s302, 256
        $region56: #{tpu_custom_call.1} parent=47 // pred_fallthru
          _
        // Predicated region
        $region57: #{tpu_custom_call.1} parent=47 // pred_check
          %p310 = pneg %p137
        $region58: #{tpu_custom_call.1} parent=47 // pred_check_branch
          %312 = sbr.rel (%p310) target = $region60
        $region59: #{tpu_custom_call.1} parent=47 // pred_region
          %313 = dma.done [#allocation6], 128
        $region60: #{tpu_custom_call.1} parent=47 // pred_fallthru
          _
        %s314 = sand.u32 %s35, 1
        %s315 = scalar_lea.sflag [#allocation3], %s314
        %s316 = sand.u32 %s35, 1
        %s317 = smul.addr %s316, 16
        %s318 = scalar_lea.vmem [#allocation2], %s317
        %p319 = pneg %p48
        %p320 = pneg %p45
        %s321 = sand.u32 %s27, 1
        %s322 = scalar_lea.sflag [#allocation6], %s321
        %s323 = sand.u32 %s61, 1
        %s324 = smul.addr %s323, 16
        %s325 = scalar_lea.vmem [#allocation5], %s324
        %p326 = pneg %p74
        %p327 = pneg %p71
        %p328 = pneg %p95
        %p329 = pneg %p92
        %p330 = pneg %p116
        %p331 = pneg %p113
        %p332 = pneg %p137
        %p333 = pneg %p134
        %p334 = pneg %p158
        %p335 = pneg %p155
        %p336 = pneg %p179
        %p337 = pneg %p176
        %p338 = pneg %p205
        %p339 = pneg %p202
        %s340 = sand.u32 %s192, 1
        %s341 = scalar_lea.sflag [#allocation4], %s340
        %s342 = sand.u32 %s192, 1
        %s343 = smul.addr %s342, 16
        %s344 = scalar_lea.vmem [#allocation8], %s343
        %v345 = vld [vmem:[%s6] ss:$8 sm:$0x3]
        %s346 = scalar_lea.vmem %s6, 1
        %v347 = vld [vmem:[%s346] ss:$8 sm:$0x3]
        %s348 = scalar_lea.vmem %s6, 2
        %v349 = vld [vmem:[%s348] ss:$8 sm:$0x3]
        %s350 = scalar_lea.vmem %s6, 3
        %v351 = vld [vmem:[%s350] ss:$8 sm:$0x3]
        %s352 = scalar_lea.vmem %s6, 4
        %v353 = vld [vmem:[%s352] ss:$8 sm:$0x3]
        %s354 = scalar_lea.vmem %s6, 5
        %v355 = vld [vmem:[%s354] ss:$8 sm:$0x3]
        %s356 = scalar_lea.vmem %s6, 6
        %v357 = vld [vmem:[%s356] ss:$8 sm:$0x3]
        %s358 = scalar_lea.vmem %s6, 7
        %v359 = vld [vmem:[%s358] ss:$8 sm:$0x3]
        %v360 = vld [vmem:[%s296] sm:$0xff]
        %v361 = vld [vmem:[%s296 + $0x8] sm:$0xff]
        %v362 = vld [vmem:[%s305] sm:$0xff]
        %v363 = vld [vmem:[%s305 + $0x8] sm:$0xff]
        %v364 = vld [vmem:[%s2] sm:$0xff]
        %v365 = vld [vmem:[%s3] sm:$0xff]
        %367 = vset.pattern.permute.xlu0 0
        %368 = vperm.xlu0 %367, %v365
        %v369 = vpop.permute.xlu0 %368
        %vm371 = vcmask 130048
        %v373 = vsel %vm371, %v364, 0
        %375 = vmatprep.subr.mxu0 0.0
        %376 = vmatpush1.msra.mxu0 0.0
        %377 = vmatprep.subr.mxu0 0.0
        %378 = vmatpush1.msra.mxu0 0.0
        %379 = vmatprep.subr.mxu0 0.0
        %380 = vmatpush1.msra.mxu0 0.0
        %381 = vmatprep.subr.mxu0 0.0
        %382 = vmatpush1.msra.mxu0 0.0
        %383 = vmatprep.subr.mxu0 0.0
        %384 = vmatpush1.msra.mxu0 0.0
        %385 = vmatprep.subr.mxu0 0.0
        %386 = vmatpush1.msra.mxu0 0.0
        %387 = vmatprep.subr.mxu0 0.0
        %388 = vmatpush1.msra.mxu0 0.0
        %389 = vmatprep.subr.mxu0 0.0
        %390 = vmatpush1.msra.mxu0 0.0
        %391 = vmatprep.subr.mxu0 0.0
        %392 = vmatpush1.msra.mxu0 0.0
        %393 = vmatprep.subr.mxu0 0.0
        %394 = vmatpush1.msra.mxu0 0.0
        %395 = vmatprep.subr.mxu0 0.0
        %396 = vmatpush1.msra.mxu0 0.0
        %397 = vmatprep.subr.mxu0 0.0
        %398 = vmatpush1.msra.mxu0 0.0
        %399 = vmatprep.subr.mxu0 0.0
        %400 = vmatpush1.msra.mxu0 0.0
        %401 = vmatprep.subr.mxu0 0.0
        %402 = vmatpush1.msra.mxu0 0.0
        %403 = vmatprep.subr.mxu0 %v363
        %404 = vmatpush1.msra.mxu0 %v362
        %405 = vmatprep.subr.mxu0 %v361
        %406 = vmatpush1.msra.mxu0 %v360
        %407 = vmatprep.subr.mxu0 0.0
        %408 = vmatpush2.msra.mxu0 0.0
        %409 = vmatprep.subr.mxu0 0.0
        %410 = vmatpush2.msra.mxu0 0.0
        %411 = vmatprep.subr.mxu0 0.0
        %412 = vmatpush2.msra.mxu0 0.0
        %413 = vmatprep.subr.mxu0 0.0
        %414 = vmatpush2.msra.mxu0 0.0
        %415 = vmatprep.subr.mxu0 0.0
        %416 = vmatpush2.msra.mxu0 0.0
        %417 = vmatprep.subr.mxu0 0.0
        %418 = vmatpush2.msra.mxu0 0.0
        %419 = vmatprep.subr.mxu0 0.0
        %420 = vmatpush2.msra.mxu0 0.0
        %421 = vmatprep.subr.mxu0 0.0
        %422 = vmatpush2.msra.mxu0 0.0
        %423 = vmatprep.subr.mxu0 0.0
        %424 = vmatpush2.msra.mxu0 0.0
        %425 = vmatprep.subr.mxu0 0.0
        %426 = vmatpush2.msra.mxu0 0.0
        %427 = vmatprep.subr.mxu0 0.0
        %428 = vmatpush2.msra.mxu0 0.0
        %429 = vmatprep.subr.mxu0 0.0
        %430 = vmatpush2.msra.mxu0 0.0
        %431 = vmatprep.subr.mxu0 0.0
        %432 = vmatpush2.msra.mxu0 0.0
        %433 = vmatprep.subr.mxu0 0.0
        %434 = vmatpush2.msra.mxu0 0.0
        %435 = vmatprep.subr.mxu0 0.0
        %436 = vmatpush2.msra.mxu0 0.0
        %437 = vmatprep.subr.mxu0 0.0
        %438 = vmatpush2.msra.mxu0 0.0
        %439 = vmatprep.mubr.f32.mxu0 0.0
        %440 = vmatmul.mubr.f32.gmra.mxu0 %v373
        %v441 = vpop.f32.mrf.mxu0
        %v442 = vadd.f32 %v369, %v441
        %v443 = vpop.f32.mrf.mxu0
        %v444 = vadd.f32 %v369, %v443
        %445 = vdwg.mxu0
        %v446 = vsub.f32 0.0, %v442
        %v447 = vsub.f32 0.0, %v444
        %v448 = vmul.f32 %v446, 1.442695
        %v449 = vpow.pop %v448
        %v450 = vmul.f32 %v447, 1.442695
        %v451 = vpow.pop %v450
        %v452 = vadd.f32 %v449, 1.0
        %v453 = vadd.f32 %v451, 1.0
        %v454 = vrcp.pop %v452
        %v455 = vrcp.pop %v453
        %v456 = vmul.f32 %v442, %v454
        %v457 = vmul.f32 %v444, %v455
        %458 = vrot.lane.b32.xlu0 %v456, 32
        %v459 = vpop.permute.xlu0 %458
        %460 = vrot.lane.b32.xlu0 %v457, 32
        %v461 = vpop.permute.xlu0 %460
        %v462 = vlaneseq
        %v463 = vand.u32 %v462, 127
        %vm464 = vcmp.lt.s32.totalorder %v463, 32
        %v465 = vsel %vm464, %v459, %v461
        %v466 = vsel %vm464, %v461, %v459
        %v468 = vlaneseq
        %v469 = vshrl.u32 %v468, 7
        %v470 = vsub.s32 0, %v469
        %v471 = vrot.slane %v345, %v470
        %v472 = vlaneseq
        %v473 = vshrl.u32 %v472, 7
        %v474 = vsub.s32 1, %v473
        %v475 = vrot.slane %v345, %v474
        %v478 = vadd.f32 %v466, %v471
        %v479 = vadd.f32 %v465, %v475
        %v480 = vmax.f32 %v456, %v478
        %v481 = vmax.f32 %v457, %v479
        %482 = vrot.lane.b32.xlu0 %v456, 16
        %v483 = vpop.permute.xlu0 %482
        %484 = vrot.lane.b32.xlu0 %v457, 16
        %v485 = vpop.permute.xlu0 %484
        %vm486 = vcmp.lt.s32.totalorder %v463, 16
        %v487 = vsel %vm486, %v483, %v485
        %v488 = vsel %vm486, %v485, %v483
        %v490 = vlaneseq
        %v491 = vshrl.u32 %v490, 7
        %v492 = vsub.s32 0, %v491
        %v493 = vrot.slane %v347, %v492
        %v494 = vlaneseq
        %v495 = vshrl.u32 %v494, 7
        %v496 = vsub.s32 1, %v495
        %v497 = vrot.slane %v347, %v496
        %v500 = vadd.f32 %v488, %v493
        %v501 = vadd.f32 %v487, %v497
        %v502 = vmax.f32 %v480, %v500
        %v503 = vmax.f32 %v481, %v501
        %504 = vrot.lane.b32.xlu0 %v456, 112
        %v505 = vpop.permute.xlu0 %504
        %506 = vrot.lane.b32.xlu0 %v457, 112
        %v507 = vpop.permute.xlu0 %506
        %vm508 = vcmp.lt.s32.totalorder %v463, 112
        %v509 = vsel %vm508, %v505, %v507
        %v510 = vsel %vm508, %v507, %v505
        %v512 = vlaneseq
        %v513 = vshrl.u32 %v512, 7
        %v514 = vsub.s32 0, %v513
        %v515 = vrot.slane %v349, %v514
        %v516 = vlaneseq
        %v517 = vshrl.u32 %v516, 7
        %v518 = vsub.s32 1, %v517
        %v519 = vrot.slane %v349, %v518
        %v522 = vadd.f32 %v509, %v515
        %v523 = vadd.f32 %v510, %v519
        %v524 = vmax.f32 %v502, %v522
        %v525 = vmax.f32 %v503, %v523
        %526 = vrot.lane.b32.xlu0 %v456, 96
        %v527 = vpop.permute.xlu0 %526
        %528 = vrot.lane.b32.xlu0 %v457, 96
        %v529 = vpop.permute.xlu0 %528
        %vm530 = vcmp.lt.s32.totalorder %v463, 96
        %v531 = vsel %vm530, %v527, %v529
        %v532 = vsel %vm530, %v529, %v527
        %v534 = vlaneseq
        %v535 = vshrl.u32 %v534, 7
        %v536 = vsub.s32 0, %v535
        %v537 = vrot.slane %v351, %v536
        %v538 = vlaneseq
        %v539 = vshrl.u32 %v538, 7
        %v540 = vsub.s32 1, %v539
        %v541 = vrot.slane %v351, %v540
        %v544 = vadd.f32 %v531, %v537
        %v545 = vadd.f32 %v532, %v541
        %v546 = vmax.f32 %v524, %v544
        %v547 = vmax.f32 %v525, %v545
        %548 = vrot.lane.b32.xlu0 %v546, 2
        %v549 = vpop.permute.xlu0 %548
        %550 = vrot.lane.b32.xlu0 %v547, 2
        %v551 = vpop.permute.xlu0 %550
        %vm552 = vcmp.lt.s32.totalorder %v463, 2
        %v553 = vsel %vm552, %v549, %v551
        %v554 = vsel %vm552, %v551, %v549
        %v556 = vlaneseq
        %v557 = vshrl.u32 %v556, 7
        %v558 = vsub.s32 0, %v557
        %v559 = vrot.slane %v353, %v558
        %v560 = vlaneseq
        %v561 = vshrl.u32 %v560, 7
        %v562 = vsub.s32 1, %v561
        %v563 = vrot.slane %v353, %v562
        %v566 = vadd.f32 %v554, %v559
        %v567 = vadd.f32 %v553, %v563
        %v568 = vmax.f32 %v546, %v566
        %v569 = vmax.f32 %v547, %v567
        %570 = vrot.lane.b32.xlu0 %v546, 1
        %v571 = vpop.permute.xlu0 %570
        %572 = vrot.lane.b32.xlu0 %v547, 1
        %v573 = vpop.permute.xlu0 %572
        %vm574 = vcmp.lt.s32.totalorder %v463, 1
        %v575 = vsel %vm574, %v571, %v573
        %v576 = vsel %vm574, %v573, %v571
        %v578 = vlaneseq
        %v579 = vshrl.u32 %v578, 7
        %v580 = vsub.s32 0, %v579
        %v581 = vrot.slane %v355, %v580
        %v582 = vlaneseq
        %v583 = vshrl.u32 %v582, 7
        %v584 = vsub.s32 1, %v583
        %v585 = vrot.slane %v355, %v584
        %v588 = vadd.f32 %v576, %v581
        %v589 = vadd.f32 %v575, %v585
        %v590 = vmax.f32 %v568, %v588
        %v591 = vmax.f32 %v569, %v589
        %592 = vrot.lane.b32.xlu0 %v546, 127
        %v593 = vpop.permute.xlu0 %592
        %594 = vrot.lane.b32.xlu0 %v547, 127
        %v595 = vpop.permute.xlu0 %594
        %vm596 = vcmp.lt.s32.totalorder %v463, 127
        %v597 = vsel %vm596, %v593, %v595
        %v598 = vsel %vm596, %v595, %v593
        %v600 = vlaneseq
        %v601 = vshrl.u32 %v600, 7
        %v602 = vsub.s32 0, %v601
        %v603 = vrot.slane %v357, %v602
        %v604 = vlaneseq
        %v605 = vshrl.u32 %v604, 7
        %v606 = vsub.s32 1, %v605
        %v607 = vrot.slane %v357, %v606
        %v610 = vadd.f32 %v597, %v603
        %v611 = vadd.f32 %v598, %v607
        %v612 = vmax.f32 %v590, %v610
        %v613 = vmax.f32 %v591, %v611
        %614 = vrot.lane.b32.xlu0 %v546, 126
        %v615 = vpop.permute.xlu0 %614
        %616 = vrot.lane.b32.xlu0 %v547, 126
        %v617 = vpop.permute.xlu0 %616
        %vm618 = vcmp.lt.s32.totalorder %v463, 126
        %v619 = vsel %vm618, %v615, %v617
        %v620 = vsel %vm618, %v617, %v615
        %v622 = vlaneseq
        %v623 = vshrl.u32 %v622, 7
        %v624 = vsub.s32 0, %v623
        %v625 = vrot.slane %v359, %v624
        %v626 = vlaneseq
        %v627 = vshrl.u32 %v626, 7
        %v628 = vsub.s32 1, %v627
        %v629 = vrot.slane %v359, %v628
        %v632 = vadd.f32 %v619, %v625
        %v633 = vadd.f32 %v620, %v629
        %v634 = vmax.f32 %v612, %v632
        %v635 = vmax.f32 %v613, %v633
        %636 = vrot.lane.b32.xlu0 %v634, 32
        %v637 = vpop.permute.xlu0 %636
        %638 = vrot.lane.b32.xlu0 %v635, 32
        %v639 = vpop.permute.xlu0 %638
        %v640 = vsel %vm464, %v637, %v639
        %v641 = vsel %vm464, %v639, %v637
        %v642 = vadd.f32 %v641, %v471
        %v643 = vadd.f32 %v640, %v475
        %v644 = vmax.f32 %v634, %v642
        %v645 = vmax.f32 %v635, %v643
        %646 = vrot.lane.b32.xlu0 %v634, 16
        %v647 = vpop.permute.xlu0 %646
        %648 = vrot.lane.b32.xlu0 %v635, 16
        %v649 = vpop.permute.xlu0 %648
        %v650 = vsel %vm486, %v647, %v649
        %v651 = vsel %vm486, %v649, %v647
        %v652 = vadd.f32 %v651, %v493
        %v653 = vadd.f32 %v650, %v497
        %v654 = vmax.f32 %v644, %v652
        %v655 = vmax.f32 %v645, %v653
        %656 = vrot.lane.b32.xlu0 %v634, 112
        %v657 = vpop.permute.xlu0 %656
        %658 = vrot.lane.b32.xlu0 %v635, 112
        %v659 = vpop.permute.xlu0 %658
        %v660 = vsel %vm508, %v657, %v659
        %v661 = vsel %vm508, %v659, %v657
        %v662 = vadd.f32 %v660, %v515
        %v663 = vadd.f32 %v661, %v519
        %v664 = vmax.f32 %v654, %v662
        %v665 = vmax.f32 %v655, %v663
        %666 = vrot.lane.b32.xlu0 %v634, 96
        %v667 = vpop.permute.xlu0 %666
        %668 = vrot.lane.b32.xlu0 %v635, 96
        %v669 = vpop.permute.xlu0 %668
        %v670 = vsel %vm530, %v667, %v669
        %v671 = vsel %vm530, %v669, %v667
        %v672 = vadd.f32 %v670, %v537
        %v673 = vadd.f32 %v671, %v541
        %v674 = vmax.f32 %v664, %v672
        %v675 = vmax.f32 %v665, %v673
        %676 = vrot.lane.b32.xlu0 %v674, 2
        %v677 = vpop.permute.xlu0 %676
        %678 = vrot.lane.b32.xlu0 %v675, 2
        %v679 = vpop.permute.xlu0 %678
        %v680 = vsel %vm552, %v677, %v679
        %v681 = vsel %vm552, %v679, %v677
        %v682 = vadd.f32 %v681, %v559
        %v683 = vadd.f32 %v680, %v563
        %v684 = vmax.f32 %v674, %v682
        %v685 = vmax.f32 %v675, %v683
        %686 = vrot.lane.b32.xlu0 %v674, 1
        %v687 = vpop.permute.xlu0 %686
        %688 = vrot.lane.b32.xlu0 %v675, 1
        %v689 = vpop.permute.xlu0 %688
        %v690 = vsel %vm574, %v687, %v689
        %v691 = vsel %vm574, %v689, %v687
        %v692 = vadd.f32 %v691, %v581
        %v693 = vadd.f32 %v690, %v585
        %v694 = vmax.f32 %v684, %v692
        %v695 = vmax.f32 %v685, %v693
        %696 = vrot.lane.b32.xlu0 %v674, 127
        %v697 = vpop.permute.xlu0 %696
        %698 = vrot.lane.b32.xlu0 %v675, 127
        %v699 = vpop.permute.xlu0 %698
        %v700 = vsel %vm596, %v697, %v699
        %v701 = vsel %vm596, %v699, %v697
        %v702 = vadd.f32 %v700, %v603
        %v703 = vadd.f32 %v701, %v607
        %v704 = vmax.f32 %v694, %v702
        %v705 = vmax.f32 %v695, %v703
        %706 = vrot.lane.b32.xlu0 %v674, 126
        %v707 = vpop.permute.xlu0 %706
        %708 = vrot.lane.b32.xlu0 %v675, 126
        %v709 = vpop.permute.xlu0 %708
        %v710 = vsel %vm618, %v707, %v709
        %v711 = vsel %vm618, %v709, %v707
        %v712 = vadd.f32 %v710, %v625
        %v713 = vadd.f32 %v711, %v629
        %v714 = vmax.f32 %v704, %v712
        %v715 = vmax.f32 %v705, %v713
        %716 = vrot.lane.b32.xlu0 %v714, 32
        %v717 = vpop.permute.xlu0 %716
        %718 = vrot.lane.b32.xlu0 %v715, 32
        %v719 = vpop.permute.xlu0 %718
        %v720 = vsel %vm464, %v717, %v719
        %v721 = vsel %vm464, %v719, %v717
        %v722 = vadd.f32 %v721, %v471
        %v723 = vadd.f32 %v720, %v475
        %v724 = vmax.f32 %v714, %v722
        %v725 = vmax.f32 %v715, %v723
        %726 = vrot.lane.b32.xlu0 %v714, 16
        %v727 = vpop.permute.xlu0 %726
        %728 = vrot.lane.b32.xlu0 %v715, 16
        %v729 = vpop.permute.xlu0 %728
        %v730 = vsel %vm486, %v727, %v729
        %v731 = vsel %vm486, %v729, %v727
        %v732 = vadd.f32 %v731, %v493
        %v733 = vadd.f32 %v730, %v497
        %v734 = vmax.f32 %v724, %v732
        %v735 = vmax.f32 %v725, %v733
        %736 = vrot.lane.b32.xlu0 %v714, 112
        %v737 = vpop.permute.xlu0 %736
        %738 = vrot.lane.b32.xlu0 %v715, 112
        %v739 = vpop.permute.xlu0 %738
        %v740 = vsel %vm508, %v737, %v739
        %v741 = vsel %vm508, %v739, %v737
        %v742 = vadd.f32 %v740, %v515
        %v743 = vadd.f32 %v741, %v519
        %v744 = vmax.f32 %v734, %v742
        %v745 = vmax.f32 %v735, %v743
        %746 = vrot.lane.b32.xlu0 %v714, 96
        %v747 = vpop.permute.xlu0 %746
        %748 = vrot.lane.b32.xlu0 %v715, 96
        %v749 = vpop.permute.xlu0 %748
        %v750 = vsel %vm530, %v747, %v749
        %v751 = vsel %vm530, %v749, %v747
        %v752 = vadd.f32 %v750, %v537
        %v753 = vadd.f32 %v751, %v541
        %v754 = vmax.f32 %v744, %v752
        %v755 = vmax.f32 %v745, %v753
        %756 = vrot.lane.b32.xlu0 %v754, 2
        %v757 = vpop.permute.xlu0 %756
        %758 = vrot.lane.b32.xlu0 %v755, 2
        %v759 = vpop.permute.xlu0 %758
        %v760 = vsel %vm552, %v757, %v759
        %v761 = vsel %vm552, %v759, %v757
        %v762 = vadd.f32 %v761, %v559
        %v763 = vadd.f32 %v760, %v563
        %v764 = vmax.f32 %v754, %v762
        %v765 = vmax.f32 %v755, %v763
        %766 = vrot.lane.b32.xlu0 %v754, 1
        %v767 = vpop.permute.xlu0 %766
        %768 = vrot.lane.b32.xlu0 %v755, 1
        %v769 = vpop.permute.xlu0 %768
        %v770 = vsel %vm574, %v767, %v769
        %v771 = vsel %vm574, %v769, %v767
        %v772 = vadd.f32 %v771, %v581
        %v773 = vadd.f32 %v770, %v585
        %v774 = vmax.f32 %v764, %v772
        %v775 = vmax.f32 %v765, %v773
        %776 = vrot.lane.b32.xlu0 %v754, 127
        %v777 = vpop.permute.xlu0 %776
        %778 = vrot.lane.b32.xlu0 %v755, 127
        %v779 = vpop.permute.xlu0 %778
        %v780 = vsel %vm596, %v777, %v779
        %v781 = vsel %vm596, %v779, %v777
        %v782 = vadd.f32 %v780, %v603
        %v783 = vadd.f32 %v781, %v607
        %v784 = vmax.f32 %v774, %v782
        %v785 = vmax.f32 %v775, %v783
        %786 = vrot.lane.b32.xlu0 %v754, 126
        %v787 = vpop.permute.xlu0 %786
        %788 = vrot.lane.b32.xlu0 %v755, 126
        %v789 = vpop.permute.xlu0 %788
        %v790 = vsel %vm618, %v787, %v789
        %v791 = vsel %vm618, %v789, %v787
        %v792 = vadd.f32 %v790, %v625
        %v793 = vadd.f32 %v791, %v629
        %v794 = vmax.f32 %v784, %v792
        %v795 = vmax.f32 %v785, %v793
        %v796 = vld [vmem:[#allocation7] sm:$0xff]
        %v797 = vld [vmem:[%s5] sm:$0xff]
        %799 = vset.pattern.permute.xlu0 0
        %800 = vperm.xlu0 %799, %v797
        %v801 = vpop.permute.xlu0 %800
        %vm803 = vcmask 261120
        %v805 = vsel %vm803, %v796, 0
        %807 = vmatprep.subr.mxu0 0.0
        %808 = vmatpush1.msra.mxu0 0.0
        %809 = vmatprep.subr.mxu0 0.0
        %810 = vmatpush1.msra.mxu0 0.0
        %811 = vmatprep.subr.mxu0 0.0
        %812 = vmatpush1.msra.mxu0 0.0
        %813 = vmatprep.subr.mxu0 0.0
        %814 = vmatpush1.msra.mxu0 0.0
        %815 = vmatprep.subr.mxu0 0.0
        %816 = vmatpush1.msra.mxu0 0.0
        %817 = vmatprep.subr.mxu0 0.0
        %818 = vmatpush1.msra.mxu0 0.0
        %819 = vmatprep.subr.mxu0 0.0
        %820 = vmatpush1.msra.mxu0 0.0
        %821 = vmatprep.subr.mxu0 0.0
        %822 = vmatpush1.msra.mxu0 0.0
        %823 = vmatprep.subr.mxu0 0.0
        %824 = vmatpush1.msra.mxu0 0.0
        %825 = vmatprep.subr.mxu0 0.0
        %826 = vmatpush1.msra.mxu0 0.0
        %827 = vmatprep.subr.mxu0 0.0
        %828 = vmatpush1.msra.mxu0 0.0
        %829 = vmatprep.subr.mxu0 0.0
        %830 = vmatpush1.msra.mxu0 0.0
        %831 = vmatprep.subr.mxu0 %v795
        %832 = vmatpush1.msra.mxu0 %v794
        %833 = vmatprep.subr.mxu0 %v715
        %834 = vmatpush1.msra.mxu0 %v714
        %835 = vmatprep.subr.mxu0 %v635
        %836 = vmatpush1.msra.mxu0 %v634
        %837 = vmatprep.subr.mxu0 %v457
        %838 = vmatpush1.msra.mxu0 %v456
        %839 = vmatprep.subr.mxu0 0.0
        %840 = vmatpush2.msra.mxu0 0.0
        %841 = vmatprep.subr.mxu0 0.0
        %842 = vmatpush2.msra.mxu0 0.0
        %843 = vmatprep.subr.mxu0 0.0
        %844 = vmatpush2.msra.mxu0 0.0
        %845 = vmatprep.subr.mxu0 0.0
        %846 = vmatpush2.msra.mxu0 0.0
        %847 = vmatprep.subr.mxu0 0.0
        %848 = vmatpush2.msra.mxu0 0.0
        %849 = vmatprep.subr.mxu0 0.0
        %850 = vmatpush2.msra.mxu0 0.0
        %851 = vmatprep.subr.mxu0 0.0
        %852 = vmatpush2.msra.mxu0 0.0
        %853 = vmatprep.subr.mxu0 0.0
        %854 = vmatpush2.msra.mxu0 0.0
        %855 = vmatprep.subr.mxu0 0.0
        %856 = vmatpush2.msra.mxu0 0.0
        %857 = vmatprep.subr.mxu0 0.0
        %858 = vmatpush2.msra.mxu0 0.0
        %859 = vmatprep.subr.mxu0 0.0
        %860 = vmatpush2.msra.mxu0 0.0
        %861 = vmatprep.subr.mxu0 0.0
        %862 = vmatpush2.msra.mxu0 0.0
        %863 = vmatprep.subr.mxu0 0.0
        %864 = vmatpush2.msra.mxu0 0.0
        %865 = vmatprep.subr.mxu0 0.0
        %866 = vmatpush2.msra.mxu0 0.0
        %867 = vmatprep.subr.mxu0 0.0
        %868 = vmatpush2.msra.mxu0 0.0
        %869 = vmatprep.subr.mxu0 0.0
        %870 = vmatpush2.msra.mxu0 0.0
        %871 = vmatprep.mubr.f32.mxu0 0.0
        %872 = vmatmul.mubr.f32.gmra.mxu0 %v805
        %v873 = vpop.f32.mrf.mxu0
        %v874 = vadd.f32 %v801, %v873
        %v875 = vpop.f32.mrf.mxu0
        %v876 = vadd.f32 %v801, %v875
        %877 = vdwg.mxu0
        %v878 = vsub.f32 0.0, %v874
        %v879 = vsub.f32 0.0, %v876
        %v880 = vmul.f32 %v878, 1.442695
        %v881 = vpow.pop %v880
        %v882 = vmul.f32 %v879, 1.442695
        %v883 = vpow.pop %v882
        %v884 = vadd.f32 %v881, 1.0
        %v885 = vadd.f32 %v883, 1.0
        %v886 = vrcp.pop %v884
        %v887 = vrcp.pop %v885
        %v888 = vmul.f32 %v874, %v886
        %v889 = vmul.f32 %v876, %v887
        %890 = vst [vmem:[%s344] sm:$0xff] %v888
        %891 = vst [vmem:[%s344 + $0x8] sm:$0xff] %v889
        %s892 = sand.u32 %s192, 1
        %s893 = scalar_lea.sflag [#allocation4], %s892
        %s894 = sand.u32 %s192, 1
        %s895 = smul.addr %s894, 16
        %s896 = scalar_lea.vmem [#allocation8], %s895
        // Predicated region
        $region61: #{tpu_custom_call.1} parent=47 // pred_check
          %p897 = pneg %p202
        $region62: #{tpu_custom_call.1} parent=47 // pred_check_branch
          %899 = sbr.rel (%p897) target = $region64
        $region63: #{tpu_custom_call.1} parent=47 // pred_region
          %s901 = ssub.s32 256, 256
          %902 = vsyncadd %s893, %s901
          %s903 = smul.addr %s27, 2
          %s904 = smul.addr %s903, 128
          %s905 = scalar_lea.hbm %s7, %s904
          %s907 = sshll.u32 %s896, 4
          %s908 = int_to_ptr.vmem [resolvable:$true] %s907
          %910 = dma.vmem_to_hbm [thread:$0]  %s908, 256, %s905, %s893
        $region64: #{tpu_custom_call.1} parent=47 // pred_fallthru
          _
      $region48: #{tpu_custom_call.1} parent=5 // pred_fallthru
        _
      %p911 = scmp.le.s32.totalorder 2, %s22
      // Predicated region
      $region65: #{tpu_custom_call.1} parent=5 // pred_check
        %p912 = pneg %p911
      $region66: #{tpu_custom_call.1} parent=5 // pred_check_branch
        %914 = sbr.rel (%p912) target = $region68
      $region67: #{tpu_custom_call.1} parent=5 // pred_region
        %s915 = ssub.s32 %s22, 2
        // Predicated region
        $region69: #{tpu_custom_call.1} parent=67 // pred_check
          %p916 = pneg %p208
        $region70: #{tpu_custom_call.1} parent=67 // pred_check_branch
          %918 = sbr.rel (%p916) target = $region72
        $region71: #{tpu_custom_call.1} parent=67 // pred_region
          %s919 = sand.u32 %s193, 1
          %s920 = scalar_lea.sflag [#allocation4], %s919
          %s921 = sand.u32 %s193, 1
          %s922 = smul.addr %s921, 16
          %s923 = scalar_lea.vmem [#allocation8], %s922
          %924 = dma.done %s920, 256
        $region72: #{tpu_custom_call.1} parent=67 // pred_fallthru
          _
      $region68: #{tpu_custom_call.1} parent=5 // pred_fallthru
        _
    $region6: #{tpu_custom_call.1} parent=1 // loop_footer
      %s26 = sadd.s32 1, %s22
    $region7: #{tpu_custom_call.1} parent=1 // loop_footer_branch
      %21 = sbr.rel target = $region3
    $region8: #{tpu_custom_call.1} parent=1 // loop_exit
      _
    %925 = vsyncpa [#allocation3], 1
    %s926 = scalar_lea.sflag [#allocation3], 1
    %927 = vsyncpa %s926, 1
    %928 = vsyncpa [#allocation6], 1
    %s929 = scalar_lea.sflag [#allocation6], 1
    %930 = vsyncpa %s929, 1
    %931 = vsyncpa [#allocation4], 1
    %s932 = scalar_lea.sflag [#allocation4], 1
    %933 = vsyncpa %s932, 1

</llo_original>
